<compile_context>
chip_gen: v6e
topology: v6e:2x2x1
jax: 0.10.0
libtpu: 0.0.40
codegen_flags: <defaults>
</compile_context>

<pallas_src>
import functools
import math

import jax
import jax.numpy as jnp
from jax.experimental import pallas as pl
from jax.experimental.pallas import tpu as pltpu


def _round_up(x, m):
    return ((x + m - 1) // m) * m


# ---------------------------------------------------------------------------
# Pallas kernel: full DuelingDQN forward for one batch tile, all in VMEM.
# refs = (x, w_trunk_0..w_trunk_{n-1}, w_head1, w_head2, bias_slab, q_out)
# ---------------------------------------------------------------------------
def _dueling_kernel(n_shared, action_size, bias_slices, *refs):
    x_ref = refs[0]
    w_refs = refs[1:1 + n_shared + 2]          # bf16, pre-fused / pre-cast
    b_ref = refs[1 + n_shared + 2]             # (1, total) f32 bias slab
    q_ref = refs[2 + n_shared + 2]             # (TB, A_out) f32

    def bias(idx):
        off, width = bias_slices[idx]          # static, 128-aligned
        return b_ref[:, off:off + width]       # (1, width) f32

    def mm(a, w_ref):
        # bf16 operands on the MXU (weights already bf16), f32 accumulate.
        return jnp.dot(a.astype(jnp.bfloat16), w_ref[...],
                       preferred_element_type=jnp.float32)

    h = x_ref[...]                             # (TB, S) f32

    # shared trunk: Linear + ReLU, statically unrolled (f32 elementwise:
    # v5e-safe; bf16 bias/ReLU on v6e/v7x is a possible further micro-opt).
    for li in range(n_shared):
        h = jnp.maximum(mm(h, w_refs[li]) + bias(li), 0.0)

    # fused head layer 1: hc = [value_hidden | advantage_hidden]
    hc = jnp.maximum(mm(h, w_refs[n_shared]) + bias(n_shared), 0.0)
    # fused block-diagonal head layer 2, lane-dense:
    #   cols [0, A) = advantage, col P-1 = value, remaining cols exactly 0
    va = mm(hc, w_refs[n_shared + 1]) + bias(n_shared + 1)   # (TB, P) f32

    p_width = va.shape[-1]
    v = va[:, p_width - 1:p_width]                           # (TB, 1) value
    a_sum = jnp.sum(va, axis=-1, keepdims=True) - v          # padded cols = 0
    mean_a = a_sum * (1.0 / action_size)                     # static 1/A
    a_out = q_ref.shape[-1]
    # narrow writeback: only the first A_out lanes are stored to HBM
    q_ref[...] = (va[:, :a_out] + v - mean_a).astype(q_ref.dtype)


def dueling_dqn_forward(x, params, *, n_shared, action_size, bias_slices,
                        block_b=2048, core_parallel=False):
    """x: (B, state_size) f32. params: flat list from pack_params()."""
    B, S = x.shape
    a_out = _round_up(action_size, 8)          # narrow, 8-lane-padded output

    bb = _round_up(min(block_b, _round_up(B, 8)), 8)
    grid = (pl.cdiv(B, bb),)                   # ragged last block is masked

    in_specs = [pl.BlockSpec((bb, S), lambda i: (i, 0))]
    # weights + bias slab: full array as one block, same block every grid step
    # -> DMA'd once, resident in VMEM across the grid.
    in_specs += [pl.BlockSpec(p.shape, lambda i: (0, 0)) for p in params]

    if core_parallel:
        # v7x: actually split the batch grid across the two TensorCores.
        sem = (getattr(pltpu, "CORE_PARALLEL", "parallel"),)
    else:
        sem = ("parallel",)

    q = pl.pallas_call(
        functools.partial(_dueling_kernel, n_shared, action_size, bias_slices),
        out_shape=jax.ShapeDtypeStruct((B, a_out), jnp.float32),
        grid=grid,
        in_specs=in_specs,
        out_specs=pl.BlockSpec((bb, a_out), lambda i: (i, 0)),
        compiler_params=pltpu.CompilerParams(dimension_semantics=sem),
    )(x, *params)
    return q[:, :action_size]


# ---------------------------------------------------------------------------
# Parameter construction (mimics the PyTorch __init__ / reset_noise).
# ---------------------------------------------------------------------------
def _init_linear(key, in_f, out_f):
    k1, k2 = jax.random.split(key)
    bound = 1.0 / math.sqrt(in_f)
    return dict(
        w=jax.random.uniform(k1, (out_f, in_f), jnp.float32, -bound, bound),
        b=jax.random.uniform(k2, (out_f,), jnp.float32, -bound, bound))


def _scale_noise(key, size):
    x = jax.random.normal(key, (size,), jnp.float32)
    return jnp.sign(x) * jnp.sqrt(jnp.abs(x))


def _init_noisy(key, in_f, out_f, std_init=0.5):
    k1, k2, k3, k4 = jax.random.split(key, 4)
    mu_range = 1.0 / math.sqrt(in_f)
    w_mu = jax.random.uniform(k1, (out_f, in_f), jnp.float32, -mu_range, mu_range)
    w_sigma = jnp.full((out_f, in_f), std_init / math.sqrt(in_f), jnp.float32)
    b_mu = jax.random.uniform(k2, (out_f,), jnp.float32, -mu_range, mu_range)
    b_sigma = jnp.full((out_f,), std_init / math.sqrt(out_f), jnp.float32)
    eps_in = _scale_noise(k3, in_f)
    eps_out = _scale_noise(k4, out_f)
    return dict(w_mu=w_mu, w_sigma=w_sigma, w_eps=jnp.outer(eps_out, eps_in),
                b_mu=b_mu, b_sigma=b_sigma, b_eps=eps_out)


def _noisy_eff(layer, training):
    if training:
        w = layer["w_mu"] + layer["w_sigma"] * layer["w_eps"]
        b = layer["b_mu"] + layer["b_sigma"] * layer["b_eps"]
    else:
        w, b = layer["w_mu"], layer["b_mu"]
    return w, b


def init_dueling_dqn(key, state_size, action_size, hidden_sizes,
                     use_noisy=True, std_init=0.5):
    """Raw f32 params matching the PyTorch module layout exactly."""
    hidden_sizes = tuple(hidden_sizes)
    n_shared = len(hidden_sizes) - 1
    keys = jax.random.split(key, n_shared + 4)

    shared = []
    prev = state_size
    for i, h in enumerate(hidden_sizes[:-1]):
        shared.append(_init_linear(keys[i], prev, h))
        prev = h
    h_last = hidden_sizes[-1]

    def make(k, in_f, out_f):
        if use_noisy:
            return _init_noisy(k, in_f, out_f, std_init)
        lin = _init_linear(k, in_f, out_f)
        zw, zb = jnp.zeros_like(lin["w"]), jnp.zeros_like(lin["b"])
        return dict(w_mu=lin["w"], w_sigma=zw, w_eps=zw,
                    b_mu=lin["b"], b_sigma=zb, b_eps=zb)

    value = [make(keys[n_shared], prev, h_last),
             make(keys[n_shared + 1], h_last, 1)]
    advantage = [make(keys[n_shared + 2], prev, h_last),
                 make(keys[n_shared + 3], h_last, action_size)]
    return dict(state_size=state_size, action_size=action_size,
                shared=shared, value=value, advantage=advantage)


def pack_params(raw, *, training=True, lane=128):
    """One-time (per reset_noise) packing: fuse noise, pad hidden widths to a
    lane multiple, fuse the two heads, pack biases into one slab, cast weights
    to bf16. Returns (flat param list, meta) for dueling_dqn_forward."""
    state_size = raw["state_size"]
    action_size = raw["action_size"]

    weights, bias_segs = [], []
    prev_real = prev_pad = state_size
    for lyr in raw["shared"]:
        out_real = lyr["w"].shape[0]
        out_pad = _round_up(out_real, lane)
        w = jnp.zeros((prev_pad, out_pad), jnp.float32)
        w = w.at[:prev_real, :out_real].set(lyr["w"].T)
        b = jnp.zeros((1, out_pad), jnp.float32).at[0, :out_real].set(lyr["b"])
        weights.append(w.astype(jnp.bfloat16))
        bias_segs.append(b)
        prev_real, prev_pad = out_real, out_pad

    h_last = raw["value"][0]["w_mu"].shape[0]
    Hp = _round_up(h_last, lane)
    P = _round_up(action_size + 1, lane)

    v1w, v1b = _noisy_eff(raw["value"][0], training)
    v2w, v2b = _noisy_eff(raw["value"][1], training)
    a1w, a1b = _noisy_eff(raw["advantage"][0], training)
    a2w, a2b = _noisy_eff(raw["advantage"][1], training)

    # fused head layer 1: cols [0,Hp) value-hidden, cols [Hp,2Hp) adv-hidden
    w1 = jnp.zeros((prev_pad, 2 * Hp), jnp.float32)
    w1 = w1.at[:prev_real, :h_last].set(v1w.T)
    w1 = w1.at[:prev_real, Hp:Hp + h_last].set(a1w.T)
    b1 = jnp.zeros((1, 2 * Hp), jnp.float32)
    b1 = b1.at[0, :h_last].set(v1b)
    b1 = b1.at[0, Hp:Hp + h_last].set(a1b)

    # fused head layer 2 (block-diagonal, lane-dense):
    #   cols [0,A) <- advantage (rows Hp:Hp+h_last), col P-1 <- value (rows :h_last)
    #   all other entries exactly zero (required by the lane-sum mean trick).
    w2 = jnp.zeros((2 * Hp, P), jnp.float32)
    w2 = w2.at[Hp:Hp + h_last, :action_size].set(a2w.T)
    w2 = w2.at[:h_last, P - 1].set(v2w[0])
    b2 = jnp.zeros((1, P), jnp.float32)
    b2 = b2.at[0, :action_size].set(a2b)
    b2 = b2.at[0, P - 1].set(v2b[0])

    weights += [w1.astype(jnp.bfloat16), w2.astype(jnp.bfloat16)]
    bias_segs += [b1, b2]

    bias_slices, off = [], 0
    for b in bias_segs:
        bias_slices.append((off, b.shape[1]))     # widths are multiples of 128
        off += b.shape[1]
    bias_slab = jnp.concatenate(bias_segs, axis=1)  # (1, total) f32

    params = weights + [bias_slab]
    meta = dict(n_shared=len(raw["shared"]), action_size=action_size,
                bias_slices=tuple(bias_slices))
    return params, meta


# ---------------------------------------------------------------------------
# References.
#   packed_reference_forward mirrors the kernel math (bf16 MXU operands).
#   reference_forward is the faithful f32 PyTorch-module semantics.
# ---------------------------------------------------------------------------
def packed_reference_forward(x, params, *, n_shared, action_size, bias_slices):
    weights, bias_slab = params[:-1], params[-1]

    def bias(i):
        off, width = bias_slices[i]
        return bias_slab[:, off:off + width]

    def mm(a, w):
        return jnp.dot(a.astype(jnp.bfloat16), w,
                       preferred_element_type=jnp.float32)

    h = x
    for li in range(n_shared):
        h = jnp.maximum(mm(h, weights[li]) + bias(li), 0.0)
    hc = jnp.maximum(mm(h, weights[n_shared]) + bias(n_shared), 0.0)
    va = mm(hc, weights[n_shared + 1]) + bias(n_shared + 1)
    P = va.shape[-1]
    v = va[:, P - 1:P]
    a = va[:, :action_size]
    return v + a - jnp.mean(a, axis=-1, keepdims=True)


def reference_forward(x, raw, *, training=True):
    h = x
    for lyr in raw["shared"]:
        h = jnp.maximum(h @ lyr["w"].T + lyr["b"], 0.0)

    def head(layers):
        w1, b1 = _noisy_eff(layers[0], training)
        hh = jnp.maximum(h @ w1.T + b1, 0.0)
        w2, b2 = _noisy_eff(layers[1], training)
        return hh @ w2.T + b2

    v = head(raw["value"])
    a = head(raw["advantage"])
    return v + a - jnp.mean(a, axis=-1, keepdims=True)


if __name__ == "__main__":
    # small shapes consistent with the module (snake DQN sizes)
    batch = 64
    state_size = 32
    action_size = 4
    hidden_sizes = (64, 32)

    key = jax.random.PRNGKey(0)
    k_x, k_p = jax.random.split(key)
    x = jax.random.normal(k_x, (batch, state_size), jnp.float32)

    raw = init_dueling_dqn(k_p, state_size, action_size, hidden_sizes,
                           use_noisy=True)
    params, meta = pack_params(raw, training=True)

    # default config: single batch tile (production default block_b=2048)
    q = jax.block_until_ready(dueling_dqn_forward(x, params, **meta))
    assert q.shape == (batch, action_size)

    # multi-step grid + ragged last block (no host-side padding of x)
    x_rag = x[:50]
    q_rag = jax.block_until_ready(
        dueling_dqn_forward(x_rag, params, block_b=32, **meta))
    assert q_rag.shape == (50, action_size)

    # tight check vs a reference that mirrors the kernel math (bf16 operands)
    q_ref = packed_reference_forward(x, params, **meta)
    err = float(jnp.max(jnp.abs(q - q_ref)))
    assert jnp.allclose(q, q_ref, atol=2e-3, rtol=2e-3), f"max abs diff {err}"

    q_rag_ref = packed_reference_forward(x_rag, params, **meta)
    err_r = float(jnp.max(jnp.abs(q_rag - q_rag_ref)))
    assert jnp.allclose(q_rag, q_rag_ref, atol=2e-3, rtol=2e-3), \
        f"ragged max abs diff {err_r}"

    # loose sanity vs the faithful pure-f32 module semantics
    q_f32 = reference_forward(x, raw, training=True)
    err32 = float(jnp.max(jnp.abs(q - q_f32)))
    assert jnp.allclose(q, q_f32, atol=5e-2, rtol=5e-2), f"max abs diff {err32}"

    print("KERNEL_OK")
</pallas_src>

<mosaic_0001>
module attributes {stable_mosaic.version = 11 : i64} {
  func.func @_dueling_kernel(%arg0: i32, %arg1: memref<64x32xf32, #tpu.memory_space<vmem>>, %arg2: memref<32x128xbf16, #tpu.memory_space<vmem>>, %arg3: memref<128x256xbf16, #tpu.memory_space<vmem>>, %arg4: memref<256x128xbf16, #tpu.memory_space<vmem>>, %arg5: memref<1x512xf32, #tpu.memory_space<vmem>>, %arg6: memref<64x8xf32, #tpu.memory_space<vmem>>) attributes {dimension_semantics = [#tpu.dimension_semantics<parallel>], iteration_bounds = array<i64: 1>, scalar_prefetch = 0 : i64, scratch_operands = 0 : i64, tpu.core_type = #tpu.core_type<tc>, window_params = [{transform_indices = @transform_0, window_bounds = array<i64: 64, 32>}, {pipeline_mode = #tpu.pipeline_mode<synchronous>, transform_indices = @transform_1, window_bounds = array<i64: 32, 128>}, {pipeline_mode = #tpu.pipeline_mode<synchronous>, transform_indices = @transform_2, window_bounds = array<i64: 128, 256>}, {pipeline_mode = #tpu.pipeline_mode<synchronous>, transform_indices = @transform_3, window_bounds = array<i64: 256, 128>}, {pipeline_mode = #tpu.pipeline_mode<synchronous>, transform_indices = @transform_4, window_bounds = array<i64: 1, 512>}, {transform_indices = @transform_5, window_bounds = array<i64: 64, 8>}]} {
    %c0 = arith.constant 0 : index
    %c0_0 = arith.constant 0 : index
    %0 = vector.load %arg1[%c0, %c0_0] : memref<64x32xf32, #tpu.memory_space<vmem>>, vector<64x32xf32>
    %1 = arith.truncf %0 : vector<64x32xf32> to vector<64x32xbf16>
    %c0_1 = arith.constant 0 : index
    %c0_2 = arith.constant 0 : index
    %2 = vector.load %arg2[%c0_1, %c0_2] : memref<32x128xbf16, #tpu.memory_space<vmem>>, vector<32x128xbf16>
    %cst = arith.constant dense<0.000000e+00> : vector<64x128xf32>
    %3 = tpu.matmul %1, %2, %cst {dimension_numbers = #tpu.dot_dimension_numbers<[1], [0], [0], [1], [0, 0, 1, 1], [], []>} : vector<64x32xbf16>, vector<32x128xbf16>, vector<64x128xf32> -> vector<64x128xf32>
    %c0_3 = arith.constant 0 : index
    %c0_4 = arith.constant 0 : index
    %4 = vector.load %arg5[%c0_3, %c0_4] : memref<1x512xf32, #tpu.memory_space<vmem>>, vector<1x128xf32>
    %5 = vector.broadcast %4 : vector<1x128xf32> to vector<64x128xf32>
    %6 = arith.addf %3, %5 : vector<64x128xf32>
    %cst_5 = arith.constant 0.000000e+00 : f32
    %7 = vector.broadcast %cst_5 : f32 to vector<64x128xf32>
    %8 = arith.maximumf %6, %7 : vector<64x128xf32>
    %9 = arith.truncf %8 : vector<64x128xf32> to vector<64x128xbf16>
    %c0_6 = arith.constant 0 : index
    %c0_7 = arith.constant 0 : index
    %10 = vector.load %arg3[%c0_6, %c0_7] : memref<128x256xbf16, #tpu.memory_space<vmem>>, vector<128x256xbf16>
    %cst_8 = arith.constant dense<0.000000e+00> : vector<64x256xf32>
    %11 = tpu.matmul %9, %10, %cst_8 {dimension_numbers = #tpu.dot_dimension_numbers<[1], [0], [0], [1], [0, 0, 1, 1], [], []>} : vector<64x128xbf16>, vector<128x256xbf16>, vector<64x256xf32> -> vector<64x256xf32>
    %c0_9 = arith.constant 0 : index
    %c128 = arith.constant 128 : index
    %12 = vector.load %arg5[%c0_9, %c128] : memref<1x512xf32, #tpu.memory_space<vmem>>, vector<1x256xf32>
    %13 = vector.broadcast %12 : vector<1x256xf32> to vector<64x256xf32>
    %14 = arith.addf %11, %13 : vector<64x256xf32>
    %cst_10 = arith.constant 0.000000e+00 : f32
    %15 = vector.broadcast %cst_10 : f32 to vector<64x256xf32>
    %16 = arith.maximumf %14, %15 : vector<64x256xf32>
    %17 = arith.truncf %16 : vector<64x256xf32> to vector<64x256xbf16>
    %c0_11 = arith.constant 0 : index
    %c0_12 = arith.constant 0 : index
    %18 = vector.load %arg4[%c0_11, %c0_12] : memref<256x128xbf16, #tpu.memory_space<vmem>>, vector<256x128xbf16>
    %cst_13 = arith.constant dense<0.000000e+00> : vector<64x128xf32>
    %19 = tpu.matmul %17, %18, %cst_13 {dimension_numbers = #tpu.dot_dimension_numbers<[1], [0], [0], [1], [0, 0, 1, 1], [], []>} : vector<64x256xbf16>, vector<256x128xbf16>, vector<64x128xf32> -> vector<64x128xf32>
    %c0_14 = arith.constant 0 : index
    %c384 = arith.constant 384 : index
    %20 = vector.load %arg5[%c0_14, %c384] : memref<1x512xf32, #tpu.memory_space<vmem>>, vector<1x128xf32>
    %21 = vector.broadcast %20 : vector<1x128xf32> to vector<64x128xf32>
    %22 = arith.addf %19, %21 : vector<64x128xf32>
    %23 = vector.extract_strided_slice %22 {offsets = [0, 127], sizes = [64, 1], strides = [1, 1]} : vector<64x128xf32> to vector<64x1xf32>
    %cst_15 = arith.constant dense<0.000000e+00> : vector<64xf32>
    %24 = vector.multi_reduction <add>, %22, %cst_15 [1] : vector<64x128xf32> to vector<64xf32>
    %25 = vector.shape_cast %24 : vector<64xf32> to vector<64x1xf32>
    %26 = arith.subf %25, %23 : vector<64x1xf32>
    %cst_16 = arith.constant 2.500000e-01 : f32
    %27 = vector.broadcast %cst_16 : f32 to vector<64x1xf32>
    %28 = arith.mulf %26, %27 : vector<64x1xf32>
    %29 = vector.extract_strided_slice %22 {offsets = [0, 0], sizes = [64, 8], strides = [1, 1]} : vector<64x128xf32> to vector<64x8xf32>
    %30 = vector.broadcast %23 : vector<64x1xf32> to vector<64x8xf32>
    %31 = arith.addf %29, %30 : vector<64x8xf32>
    %32 = vector.broadcast %28 : vector<64x1xf32> to vector<64x8xf32>
    %33 = arith.subf %31, %32 : vector<64x8xf32>
    %c0_17 = arith.constant 0 : index
    %c0_18 = arith.constant 0 : index
    %34 = vector.load %arg6[%c0_17, %c0_18] : memref<64x8xf32, #tpu.memory_space<vmem>>, vector<64x8xf32>
    tpu.vector_store %arg6[%c0_17, %c0_18], %33 {strides = array<i32>} : memref<64x8xf32, #tpu.memory_space<vmem>>, vector<64x8xf32>,
    return
  }
  func.func @transform_0(%arg0: i32) -> (i32, i32) {
    %c0_i32 = arith.constant 0 : i32
    %c0_i32_0 = arith.constant 0 : i32
    return %arg0, %c0_i32 : i32, i32
  }
  func.func @transform_1(%arg0: i32) -> (i32, i32) {
    %c0_i32 = arith.constant 0 : i32
    %c0_i32_0 = arith.constant 0 : i32
    %c0_i32_1 = arith.constant 0 : i32
    return %c0_i32, %c0_i32_0 : i32, i32
  }
  func.func @transform_2(%arg0: i32) -> (i32, i32) {
    %c0_i32 = arith.constant 0 : i32
    %c0_i32_0 = arith.constant 0 : i32
    %c0_i32_1 = arith.constant 0 : i32
    return %c0_i32, %c0_i32_0 : i32, i32
  }
  func.func @transform_3(%arg0: i32) -> (i32, i32) {
    %c0_i32 = arith.constant 0 : i32
    %c0_i32_0 = arith.constant 0 : i32
    %c0_i32_1 = arith.constant 0 : i32
    return %c0_i32, %c0_i32_0 : i32, i32
  }
  func.func @transform_4(%arg0: i32) -> (i32, i32) {
    %c0_i32 = arith.constant 0 : i32
    %c0_i32_0 = arith.constant 0 : i32
    %c0_i32_1 = arith.constant 0 : i32
    return %c0_i32, %c0_i32_0 : i32, i32
  }
  func.func @transform_5(%arg0: i32) -> (i32, i32) {
    %c0_i32 = arith.constant 0 : i32
    %c0_i32_0 = arith.constant 0 : i32
    return %arg0, %c0_i32 : i32, i32
  }
}

</mosaic_0001>

<llo_original>
// kernel: tpu_custom_call.1
$region0: #{tpu_custom_call.1}
  #allocation0 [shape = 'u32[]', space=smem, size = 0x4, offset = 0x4, fixed_abs, tag = 'smem constant byte address 0x4 - core index']
  #allocation1 [shape = 'u32[144,128]{1,0:T(1,128)}', space=vmem, size = 0x12000, scoped, tag = 'internal scratch']
  %s0 = inlined_call_operand.vmem [shape: f32[64,32], index: 0, kind: input, shape index: {}]
  %s1 = inlined_call_operand.vmem [shape: bf16[32,128], index: 1, kind: input, shape index: {}]
  %s2 = inlined_call_operand.hbm [shape: bf16[128,256], index: 2, kind: input, shape index: {}]
  %s3 = inlined_call_operand.hbm [shape: bf16[256,128], index: 3, kind: input, shape index: {}]
  %s4 = inlined_call_operand.vmem [shape: f32[1,512], index: 4, kind: input, shape index: {}]
  %s5 = inlined_call_operand.vmem [shape: f32[64,8], index: 5, kind: output, shape index: {}]
  %s6 = sld [smem:[#allocation0]]
  $region38: #{tpu_custom_call.1} parent=0
    _
  %s8 = ssub.s32 1, %s6
  %s9 = scalar_select 0, %s8, %s6
  $region1: #{tpu_custom_call.1} parent=0
    #allocation2 [shape = 'u8[65536]{0}', space=vmem, size = 0x10000, scoped, tag = 'input window, operand 2, single buffered']
    #allocation3 [shape = 's32[1]{0}', space=sflag, size = 0x4, scoped, tag = 'scoped memory for tpu_custom_call.1']
    #allocation4 [shape = 'u8[65536]{0}', space=vmem, size = 0x10000, scoped, tag = 'input window, operand 3, single buffered']
    #allocation5 [shape = 's32[1]{0}', space=sflag, size = 0x4, scoped, tag = 'scoped memory for tpu_custom_call.1']
    %10 = vsyncpa [#allocation3], 0
    %11 = vsyncpa [#allocation5], 0
    // Predicated region
    $region2: #{tpu_custom_call.1} parent=1 // pred_check
      _
    $region3: #{tpu_custom_call.1} parent=1 // pred_check_branch
      %13 = sbr.rel (0) target = $region5
    $region4: #{tpu_custom_call.1} parent=1 // pred_region
      _
    $region5: #{tpu_custom_call.1} parent=1 // pred_fallthru
      _
    // Predicated region
    $region6: #{tpu_custom_call.1} parent=1 // pred_check
      _
    $region7: #{tpu_custom_call.1} parent=1 // pred_check_branch
      %15 = sbr.rel (0) target = $region9
    $region8: #{tpu_custom_call.1} parent=1 // pred_region
      _
    $region9: #{tpu_custom_call.1} parent=1 // pred_fallthru
      _
    // Predicated region
    $region10: #{tpu_custom_call.1} parent=1 // pred_check
      _
    $region11: #{tpu_custom_call.1} parent=1 // pred_check_branch
      %17 = sbr.rel (0) target = $region13
    $region12: #{tpu_custom_call.1} parent=1 // pred_region
      %s19 = ssub.s32 2048, 2048
      %20 = vsyncadd [#allocation3], %s19
      %s21 = sshll.u32 [#allocation2], 4
      %s22 = int_to_ptr.vmem [resolvable:$true] %s21
      %27 = dma.hbm_to_vmem [thread:$0]  %s2, 2048, %s22, [#allocation3], 128, 128, 8
    $region13: #{tpu_custom_call.1} parent=1 // pred_fallthru
      _
    // Predicated region
    $region14: #{tpu_custom_call.1} parent=1 // pred_check
      _
    $region15: #{tpu_custom_call.1} parent=1 // pred_check_branch
      %29 = sbr.rel (0) target = $region17
    $region16: #{tpu_custom_call.1} parent=1 // pred_region
      %s31 = ssub.s32 2048, 2048
      %32 = vsyncadd [#allocation5], %s31
      %s33 = sshll.u32 [#allocation4], 4
      %s34 = int_to_ptr.vmem [resolvable:$true] %s33
      %39 = dma.hbm_to_vmem [thread:$0]  %s3, 2048, %s34, [#allocation5], 64, 64, 4
    $region17: #{tpu_custom_call.1} parent=1 // pred_fallthru
      _
    // Predicated region
    $region18: #{tpu_custom_call.1} parent=1 // pred_check
      _
    $region19: #{tpu_custom_call.1} parent=1 // pred_check_branch
      %41 = sbr.rel (0) target = $region21
    $region20: #{tpu_custom_call.1} parent=1 // pred_region
      _
    $region21: #{tpu_custom_call.1} parent=1 // pred_fallthru
      _
    // Predicated region
    $region22: #{tpu_custom_call.1} parent=1 // pred_check
      _
    $region23: #{tpu_custom_call.1} parent=1 // pred_check_branch
      %43 = sbr.rel (0) target = $region25
    $region24: #{tpu_custom_call.1} parent=1 // pred_region
      %44 = dma.done [#allocation3], 2048
    $region25: #{tpu_custom_call.1} parent=1 // pred_fallthru
      _
    // Predicated region
    $region26: #{tpu_custom_call.1} parent=1 // pred_check
      _
    $region27: #{tpu_custom_call.1} parent=1 // pred_check_branch
      %46 = sbr.rel (0) target = $region29
    $region28: #{tpu_custom_call.1} parent=1 // pred_region
      %47 = dma.done [#allocation5], 2048
    $region29: #{tpu_custom_call.1} parent=1 // pred_fallthru
      _
    %v49 = vld [vmem:[%s0] sm:$0xff]
    %v50 = vld [vmem:[%s0 + $0x8] sm:$0xff]
    %v51 = vld [vmem:[%s0 + $0x10] sm:$0xff]
    %v52 = vld [vmem:[%s0 + $0x18] sm:$0xff]
    %v53 = vld [vmem:[%s0 + $0x20] sm:$0xff]
    %v54 = vld [vmem:[%s0 + $0x28] sm:$0xff]
    %v55 = vld [vmem:[%s0 + $0x30] sm:$0xff]
    %v56 = vld [vmem:[%s0 + $0x38] sm:$0xff]
    %v57 = vpack.c.bf16 %v50, %v49
    %v58 = vpack.c.bf16 %v52, %v51
    %v59 = vpack.c.bf16 %v54, %v53
    %v60 = vpack.c.bf16 %v56, %v55
    %v61 = vld [vmem:[%s1] sm:$0xf]
    %v62 = vld [vmem:[%s1 + $0x4] sm:$0xf]
    %v63 = vld [vmem:[%s1 + $0x8] sm:$0xf]
    %v64 = vld [vmem:[%s1 + $0xc] sm:$0xf]
    %v65 = vld [vmem:[%s4] sm:$0x1]
    %v67 = vlaneseq
    %v68 = vshrl.u32 %v67, 7
    %v69 = vsub.s32 0, %v68
    %v70 = vrot.slane %v65, %v69
    %v76 = vunpack.c.l.b16 %v61
    %v77 = vunpack.c.l.b16 %v62
    %v78 = vunpack.c.l.b16 %v63
    %v79 = vunpack.c.l.b16 %v64
    %v80 = vpack.c.b16 %v77, %v76
    %v81 = vpack.c.b16 %v79, %v78
    %vm84 = vcmask 261120
    %v86 = vsel %vm84, %v57, 0
    %v89 = vsel %vm84, %v58, 0
    %v92 = vsel %vm84, %v59, 0
    %v95 = vsel %vm84, %v60, 0
    %97 = vmatprep.subr.bf16.mxu0 0
    %98 = vmatpush1.bf16.msra.mxu0 0
    %99 = vmatprep.subr.bf16.mxu0 0
    %100 = vmatpush1.bf16.msra.mxu0 0
    %101 = vmatprep.subr.bf16.mxu0 0
    %102 = vmatpush1.bf16.msra.mxu0 0
    %103 = vmatprep.subr.bf16.mxu0 0
    %104 = vmatpush1.bf16.msra.mxu0 0
    %105 = vmatprep.subr.bf16.mxu0 0
    %106 = vmatpush1.bf16.msra.mxu0 0
    %107 = vmatprep.subr.bf16.mxu0 0
    %108 = vmatpush1.bf16.msra.mxu0 0
    %109 = vmatprep.subr.bf16.mxu0 0
    %110 = vmatpush1.bf16.msra.mxu0 %v81
    %111 = vmatprep.subr.bf16.mxu0 0
    %112 = vmatpush1.bf16.msra.mxu0 %v80
    %113 = vmatprep.subr.bf16.mxu0 0
    %114 = vmatpush2.bf16.msra.mxu0 0
    %115 = vmatprep.subr.bf16.mxu0 0
    %116 = vmatpush2.bf16.msra.mxu0 0
    %117 = vmatprep.subr.bf16.mxu0 0
    %118 = vmatpush2.bf16.msra.mxu0 0
    %119 = vmatprep.subr.bf16.mxu0 0
    %120 = vmatpush2.bf16.msra.mxu0 0
    %121 = vmatprep.subr.bf16.mxu0 0
    %122 = vmatpush2.bf16.msra.mxu0 0
    %123 = vmatprep.subr.bf16.mxu0 0
    %124 = vmatpush2.bf16.msra.mxu0 0
    %125 = vmatprep.subr.bf16.mxu0 0
    %126 = vmatpush2.bf16.msra.mxu0 0
    %127 = vmatprep.subr.bf16.mxu0 0
    %128 = vmatpush2.bf16.msra.mxu0 0
    %129 = vmatprep.mubr.bf16.mxu0 0
    %130 = vmatmul.mubr.bf16.gmra.mxu0 %v86
    %v131 = vpop.f32.mrf.mxu0
    %v132 = vadd.f32 %v70, %v131
    %v133 = vpop.f32.mrf.mxu0
    %v134 = vpop.f32.mrf.mxu0
    %v135 = vadd.f32 %v70, %v134
    %v136 = vpop.f32.mrf.mxu0
    %137 = vmatprep.mubr.bf16.mxu0 0
    %138 = vmatmul.mubr.bf16.gmra.mxu0 %v89
    %v139 = vpop.f32.mrf.mxu0
    %v140 = vadd.f32 %v70, %v139
    %v141 = vpop.f32.mrf.mxu0
    %v142 = vpop.f32.mrf.mxu0
    %v143 = vadd.f32 %v70, %v142
    %v144 = vpop.f32.mrf.mxu0
    %145 = vmatprep.mubr.bf16.mxu0 0
    %146 = vmatmul.mubr.bf16.gmra.mxu0 %v92
    %v147 = vpop.f32.mrf.mxu0
    %v148 = vadd.f32 %v70, %v147
    %v149 = vpop.f32.mrf.mxu0
    %v150 = vpop.f32.mrf.mxu0
    %v151 = vadd.f32 %v70, %v150
    %v152 = vpop.f32.mrf.mxu0
    %153 = vmatprep.mubr.bf16.mxu0 0
    %154 = vmatmul.mubr.bf16.gmra.mxu0 %v95
    %v155 = vpop.f32.mrf.mxu0
    %v156 = vadd.f32 %v70, %v155
    %v157 = vpop.f32.mrf.mxu0
    %v158 = vpop.f32.mrf.mxu0
    %v159 = vadd.f32 %v70, %v158
    %v160 = vpop.f32.mrf.mxu0
    %161 = vdwg.mxu0
    %v162 = vmax.f32 %v132, 0.0
    %v163 = vmax.f32 %v135, 0.0
    %v164 = vmax.f32 %v140, 0.0
    %v165 = vmax.f32 %v143, 0.0
    %v166 = vmax.f32 %v148, 0.0
    %v167 = vmax.f32 %v151, 0.0
    %v168 = vmax.f32 %v156, 0.0
    %v169 = vmax.f32 %v159, 0.0
    %v170 = vpack.c.bf16 %v163, %v162
    %v171 = vpack.c.bf16 %v165, %v164
    %v172 = vpack.c.bf16 %v167, %v166
    %v173 = vpack.c.bf16 %v169, %v168
    %v174 = vld [vmem:[#allocation2] sm:$0xff]
    %v175 = vld [vmem:[#allocation2 + $0x8] sm:$0xff]
    %v176 = vld [vmem:[#allocation2 + $0x10] sm:$0xff]
    %v177 = vld [vmem:[#allocation2 + $0x18] sm:$0xff]
    %v178 = vld [vmem:[#allocation2 + $0x20] sm:$0xff]
    %v179 = vld [vmem:[#allocation2 + $0x28] sm:$0xff]
    %v180 = vld [vmem:[#allocation2 + $0x30] sm:$0xff]
    %v181 = vld [vmem:[#allocation2 + $0x38] sm:$0xff]
    %v182 = vld [vmem:[#allocation2 + $0x40] sm:$0xff]
    %v183 = vld [vmem:[#allocation2 + $0x48] sm:$0xff]
    %v184 = vld [vmem:[#allocation2 + $0x50] sm:$0xff]
    %v185 = vld [vmem:[#allocation2 + $0x58] sm:$0xff]
    %v186 = vld [vmem:[#allocation2 + $0x60] sm:$0xff]
    %v187 = vld [vmem:[#allocation2 + $0x68] sm:$0xff]
    %v188 = vld [vmem:[#allocation2 + $0x70] sm:$0xff]
    %v189 = vld [vmem:[#allocation2 + $0x78] sm:$0xff]
    %v190 = vld [vmem:[%s4 + $0x1] sm:$0x3]
    %v192 = vlaneseq
    %v193 = vshrl.u32 %v192, 7
    %v194 = vsub.s32 0, %v193
    %v195 = vrot.slane %v190, %v194
    %v196 = vlaneseq
    %v197 = vshrl.u32 %v196, 7
    %v198 = vsub.s32 1, %v197
    %v199 = vrot.slane %v190, %v198
    %v218 = vunpack.c.l.b16 %v174
    %v219 = vunpack.c.h.b16 %v174
    %v220 = vunpack.c.l.b16 %v175
    %v221 = vunpack.c.h.b16 %v175
    %v222 = vunpack.c.l.b16 %v176
    %v223 = vunpack.c.h.b16 %v176
    %v224 = vunpack.c.l.b16 %v177
    %v225 = vunpack.c.h.b16 %v177
    %v226 = vunpack.c.l.b16 %v178
    %v227 = vunpack.c.h.b16 %v178
    %v228 = vunpack.c.l.b16 %v179
    %v229 = vunpack.c.h.b16 %v179
    %v230 = vunpack.c.l.b16 %v180
    %v231 = vunpack.c.h.b16 %v180
    %v232 = vunpack.c.l.b16 %v181
    %v233 = vunpack.c.h.b16 %v181
    %v234 = vunpack.c.l.b16 %v182
    %v235 = vunpack.c.h.b16 %v182
    %v236 = vunpack.c.l.b16 %v183
    %v237 = vunpack.c.h.b16 %v183
    %v238 = vunpack.c.l.b16 %v184
    %v239 = vunpack.c.h.b16 %v184
    %v240 = vunpack.c.l.b16 %v185
    %v241 = vunpack.c.h.b16 %v185
    %v242 = vunpack.c.l.b16 %v186
    %v243 = vunpack.c.h.b16 %v186
    %v244 = vunpack.c.l.b16 %v187
    %v245 = vunpack.c.h.b16 %v187
    %v246 = vunpack.c.l.b16 %v188
    %v247 = vunpack.c.h.b16 %v188
    %v248 = vunpack.c.l.b16 %v189
    %v249 = vunpack.c.h.b16 %v189
    %v250 = vpack.c.b16 %v220, %v218
    %v251 = vpack.c.b16 %v221, %v219
    %v252 = vpack.c.b16 %v224, %v222
    %v253 = vpack.c.b16 %v225, %v223
    %v254 = vpack.c.b16 %v228, %v226
    %v255 = vpack.c.b16 %v229, %v227
    %v256 = vpack.c.b16 %v232, %v230
    %v257 = vpack.c.b16 %v233, %v231
    %v258 = vpack.c.b16 %v236, %v234
    %v259 = vpack.c.b16 %v237, %v235
    %v260 = vpack.c.b16 %v240, %v238
    %v261 = vpack.c.b16 %v241, %v239
    %v262 = vpack.c.b16 %v244, %v242
    %v263 = vpack.c.b16 %v245, %v243
    %v264 = vpack.c.b16 %v248, %v246
    %v265 = vpack.c.b16 %v249, %v247
    %282 = vmatprep.subr.bf16.mxu0 %v265
    %283 = vmatpush1.bf16.msra.mxu0 %v264
    %284 = vmatprep.subr.bf16.mxu0 %v263
    %285 = vmatpush1.bf16.msra.mxu0 %v262
    %286 = vmatprep.subr.bf16.mxu0 %v261
    %287 = vmatpush1.bf16.msra.mxu0 %v260
    %288 = vmatprep.subr.bf16.mxu0 %v259
    %289 = vmatpush1.bf16.msra.mxu0 %v258
    %290 = vmatprep.subr.bf16.mxu0 %v257
    %291 = vmatpush1.bf16.msra.mxu0 %v256
    %292 = vmatprep.subr.bf16.mxu0 %v255
    %293 = vmatpush1.bf16.msra.mxu0 %v254
    %294 = vmatprep.subr.bf16.mxu0 %v253
    %295 = vmatpush1.bf16.msra.mxu0 %v252
    %296 = vmatprep.subr.bf16.mxu0 %v251
    %297 = vmatpush1.bf16.msra.mxu0 %v250
    %298 = vmatprep.subr.bf16.mxu0 0
    %299 = vmatpush2.bf16.msra.mxu0 0
    %300 = vmatprep.subr.bf16.mxu0 0
    %301 = vmatpush2.bf16.msra.mxu0 0
    %302 = vmatprep.subr.bf16.mxu0 0
    %303 = vmatpush2.bf16.msra.mxu0 0
    %304 = vmatprep.subr.bf16.mxu0 0
    %305 = vmatpush2.bf16.msra.mxu0 0
    %306 = vmatprep.subr.bf16.mxu0 0
    %307 = vmatpush2.bf16.msra.mxu0 0
    %308 = vmatprep.subr.bf16.mxu0 0
    %309 = vmatpush2.bf16.msra.mxu0 0
    %310 = vmatprep.subr.bf16.mxu0 0
    %311 = vmatpush2.bf16.msra.mxu0 0
    %312 = vmatprep.subr.bf16.mxu0 0
    %313 = vmatpush2.bf16.msra.mxu0 0
    %314 = vmatprep.mubr.bf16.mxu0 0
    %315 = vmatmul.mubr.bf16.gmra.mxu0 %v170
    %v316 = vpop.f32.mrf.mxu0
    %v317 = vadd.f32 %v195, %v316
    %v318 = vpop.f32.mrf.mxu0
    %v319 = vadd.f32 %v199, %v318
    %v320 = vpop.f32.mrf.mxu0
    %v321 = vadd.f32 %v195, %v320
    %v322 = vpop.f32.mrf.mxu0
    %v323 = vadd.f32 %v199, %v322
    %324 = vmatprep.mubr.bf16.mxu0 0
    %325 = vmatmul.mubr.bf16.gmra.mxu0 %v171
    %v326 = vpop.f32.mrf.mxu0
    %v327 = vadd.f32 %v195, %v326
    %v328 = vpop.f32.mrf.mxu0
    %v329 = vadd.f32 %v199, %v328
    %v330 = vpop.f32.mrf.mxu0
    %v331 = vadd.f32 %v195, %v330
    %v332 = vpop.f32.mrf.mxu0
    %v333 = vadd.f32 %v199, %v332
    %334 = vmatprep.mubr.bf16.mxu0 0
    %335 = vmatmul.mubr.bf16.gmra.mxu0 %v172
    %v336 = vpop.f32.mrf.mxu0
    %v337 = vadd.f32 %v195, %v336
    %v338 = vpop.f32.mrf.mxu0
    %v339 = vadd.f32 %v199, %v338
    %v340 = vpop.f32.mrf.mxu0
    %v341 = vadd.f32 %v195, %v340
    %v342 = vpop.f32.mrf.mxu0
    %v343 = vadd.f32 %v199, %v342
    %344 = vmatprep.mubr.bf16.mxu0 0
    %345 = vmatmul.mubr.bf16.gmra.mxu0 %v173
    %v346 = vpop.f32.mrf.mxu0
    %v347 = vadd.f32 %v195, %v346
    %v348 = vpop.f32.mrf.mxu0
    %v349 = vadd.f32 %v199, %v348
    %v350 = vpop.f32.mrf.mxu0
    %v351 = vadd.f32 %v195, %v350
    %v352 = vpop.f32.mrf.mxu0
    %v353 = vadd.f32 %v199, %v352
    %354 = vdwg.mxu0
    %v355 = vmax.f32 %v317, 0.0
    %v356 = vmax.f32 %v319, 0.0
    %v357 = vmax.f32 %v321, 0.0
    %v358 = vmax.f32 %v323, 0.0
    %v359 = vmax.f32 %v327, 0.0
    %v360 = vmax.f32 %v329, 0.0
    %v361 = vmax.f32 %v331, 0.0
    %v362 = vmax.f32 %v333, 0.0
    %v363 = vmax.f32 %v337, 0.0
    %v364 = vmax.f32 %v339, 0.0
    %v365 = vmax.f32 %v341, 0.0
    %v366 = vmax.f32 %v343, 0.0
    %v367 = vmax.f32 %v347, 0.0
    %v368 = vmax.f32 %v349, 0.0
    %v369 = vmax.f32 %v351, 0.0
    %v370 = vmax.f32 %v353, 0.0
    %v371 = vpack.c.bf16 %v357, %v355
    %v372 = vpack.c.bf16 %v358, %v356
    %v373 = vpack.c.bf16 %v361, %v359
    %v374 = vpack.c.bf16 %v362, %v360
    %v375 = vpack.c.bf16 %v365, %v363
    %v376 = vpack.c.bf16 %v366, %v364
    %v377 = vpack.c.bf16 %v369, %v367
    %v378 = vpack.c.bf16 %v370, %v368
    %v379 = vld [vmem:[#allocation4] sm:$0xf]
    %v380 = vld [vmem:[#allocation4 + $0x4] sm:$0xf]
    %v381 = vld [vmem:[#allocation4 + $0x8] sm:$0xf]
    %v382 = vld [vmem:[#allocation4 + $0xc] sm:$0xf]
    %v383 = vld [vmem:[#allocation4 + $0x10] sm:$0xf]
    %v384 = vld [vmem:[#allocation4 + $0x14] sm:$0xf]
    %v385 = vld [vmem:[#allocation4 + $0x18] sm:$0xf]
    %v386 = vld [vmem:[#allocation4 + $0x1c] sm:$0xf]
    %v387 = vld [vmem:[#allocation4 + $0x20] sm:$0xf]
    %v388 = vld [vmem:[#allocation4 + $0x24] sm:$0xf]
    %v389 = vld [vmem:[#allocation4 + $0x28] sm:$0xf]
    %v390 = vld [vmem:[#allocation4 + $0x2c] sm:$0xf]
    %v391 = vld [vmem:[#allocation4 + $0x30] sm:$0xf]
    %v392 = vld [vmem:[#allocation4 + $0x34] sm:$0xf]
    %v393 = vld [vmem:[#allocation4 + $0x38] sm:$0xf]
    %v394 = vld [vmem:[#allocation4 + $0x3c] sm:$0xf]
    %v395 = vld [vmem:[#allocation4 + $0x40] sm:$0xf]
    %v396 = vld [vmem:[#allocation4 + $0x44] sm:$0xf]
    %v397 = vld [vmem:[#allocation4 + $0x48] sm:$0xf]
    %v398 = vld [vmem:[#allocation4 + $0x4c] sm:$0xf]
    %v399 = vld [vmem:[#allocation4 + $0x50] sm:$0xf]
    %v400 = vld [vmem:[#allocation4 + $0x54] sm:$0xf]
    %v401 = vld [vmem:[#allocation4 + $0x58] sm:$0xf]
    %v402 = vld [vmem:[#allocation4 + $0x5c] sm:$0xf]
    %v403 = vld [vmem:[#allocation4 + $0x60] sm:$0xf]
    %v404 = vld [vmem:[#allocation4 + $0x64] sm:$0xf]
    %v405 = vld [vmem:[#allocation4 + $0x68] sm:$0xf]
    %v406 = vld [vmem:[#allocation4 + $0x6c] sm:$0xf]
    %v407 = vld [vmem:[#allocation4 + $0x70] sm:$0xf]
    %v408 = vld [vmem:[#allocation4 + $0x74] sm:$0xf]
    %v409 = vld [vmem:[#allocation4 + $0x78] sm:$0xf]
    %v410 = vld [vmem:[#allocation4 + $0x7c] sm:$0xf]
    %v411 = vld [vmem:[%s4 + $0x3] sm:$0x1]
    %v413 = vlaneseq
    %v414 = vshrl.u32 %v413, 7
    %v415 = vsub.s32 0, %v414
    %v416 = vrot.slane %v411, %v415
    %v450 = vunpack.c.l.b16 %v379
    %v451 = vunpack.c.l.b16 %v380
    %v452 = vunpack.c.l.b16 %v381
    %v453 = vunpack.c.l.b16 %v382
    %v454 = vunpack.c.l.b16 %v383
    %v455 = vunpack.c.l.b16 %v384
    %v456 = vunpack.c.l.b16 %v385
    %v457 = vunpack.c.l.b16 %v386
    %v458 = vunpack.c.l.b16 %v387
    %v459 = vunpack.c.l.b16 %v388
    %v460 = vunpack.c.l.b16 %v389
    %v461 = vunpack.c.l.b16 %v390
    %v462 = vunpack.c.l.b16 %v391
    %v463 = vunpack.c.l.b16 %v392
    %v464 = vunpack.c.l.b16 %v393
    %v465 = vunpack.c.l.b16 %v394
    %v466 = vunpack.c.l.b16 %v395
    %v467 = vunpack.c.l.b16 %v396
    %v468 = vunpack.c.l.b16 %v397
    %v469 = vunpack.c.l.b16 %v398
    %v470 = vunpack.c.l.b16 %v399
    %v471 = vunpack.c.l.b16 %v400
    %v472 = vunpack.c.l.b16 %v401
    %v473 = vunpack.c.l.b16 %v402
    %v474 = vunpack.c.l.b16 %v403
    %v475 = vunpack.c.l.b16 %v404
    %v476 = vunpack.c.l.b16 %v405
    %v477 = vunpack.c.l.b16 %v406
    %v478 = vunpack.c.l.b16 %v407
    %v479 = vunpack.c.l.b16 %v408
    %v480 = vunpack.c.l.b16 %v409
    %v481 = vunpack.c.l.b16 %v410
    %v482 = vpack.c.b16 %v451, %v450
    %v483 = vpack.c.b16 %v453, %v452
    %v484 = vpack.c.b16 %v455, %v454
    %v485 = vpack.c.b16 %v457, %v456
    %v486 = vpack.c.b16 %v459, %v458
    %v487 = vpack.c.b16 %v461, %v460
    %v488 = vpack.c.b16 %v463, %v462
    %v489 = vpack.c.b16 %v465, %v464
    %v490 = vpack.c.b16 %v467, %v466
    %v491 = vpack.c.b16 %v469, %v468
    %v492 = vpack.c.b16 %v471, %v470
    %v493 = vpack.c.b16 %v473, %v472
    %v494 = vpack.c.b16 %v475, %v474
    %v495 = vpack.c.b16 %v477, %v476
    %v496 = vpack.c.b16 %v479, %v478
    %v497 = vpack.c.b16 %v481, %v480
    %514 = vmatprep.subr.bf16.mxu0 0
    %515 = vmatpush1.bf16.msra.mxu0 %v489
    %516 = vmatprep.subr.bf16.mxu0 0
    %517 = vmatpush1.bf16.msra.mxu0 %v488
    %518 = vmatprep.subr.bf16.mxu0 0
    %519 = vmatpush1.bf16.msra.mxu0 %v487
    %520 = vmatprep.subr.bf16.mxu0 0
    %521 = vmatpush1.bf16.msra.mxu0 %v486
    %522 = vmatprep.subr.bf16.mxu0 0
    %523 = vmatpush1.bf16.msra.mxu0 %v485
    %524 = vmatprep.subr.bf16.mxu0 0
    %525 = vmatpush1.bf16.msra.mxu0 %v484
    %526 = vmatprep.subr.bf16.mxu0 0
    %527 = vmatpush1.bf16.msra.mxu0 %v483
    %528 = vmatprep.subr.bf16.mxu0 0
    %529 = vmatpush1.bf16.msra.mxu0 %v482
    %530 = vmatprep.subr.bf16.mxu0 0
    %531 = vmatpush2.bf16.msra.mxu0 %v497
    %532 = vmatprep.subr.bf16.mxu0 0
    %533 = vmatpush2.bf16.msra.mxu0 %v496
    %534 = vmatprep.subr.bf16.mxu0 0
    %535 = vmatpush2.bf16.msra.mxu0 %v495
    %536 = vmatprep.subr.bf16.mxu0 0
    %537 = vmatpush2.bf16.msra.mxu0 %v494
    %538 = vmatprep.subr.bf16.mxu0 0
    %539 = vmatpush2.bf16.msra.mxu0 %v493
    %540 = vmatprep.subr.bf16.mxu0 0
    %541 = vmatpush2.bf16.msra.mxu0 %v492
    %542 = vmatprep.subr.bf16.mxu0 0
    %543 = vmatpush2.bf16.msra.mxu0 %v491
    %544 = vmatprep.subr.bf16.mxu0 0
    %545 = vmatpush2.bf16.msra.mxu0 %v490
    %546 = vmatprep.mubr.bf16.mxu0 %v372
    %547 = vmatmul.mubr.bf16.gmra.mxu0 %v371
    %v548 = vpop.f32.mrf.mxu0
    %v549 = vadd.f32 %v416, %v548
    %v550 = vpop.f32.mrf.mxu0
    %v551 = vpop.f32.mrf.mxu0
    %v552 = vadd.f32 %v416, %v551
    %v553 = vpop.f32.mrf.mxu0
    %554 = vmatprep.mubr.bf16.mxu0 %v374
    %555 = vmatmul.mubr.bf16.gmra.mxu0 %v373
    %v556 = vpop.f32.mrf.mxu0
    %v557 = vadd.f32 %v416, %v556
    %v558 = vpop.f32.mrf.mxu0
    %v559 = vpop.f32.mrf.mxu0
    %v560 = vadd.f32 %v416, %v559
    %v561 = vpop.f32.mrf.mxu0
    %562 = vmatprep.mubr.bf16.mxu0 %v376
    %563 = vmatmul.mubr.bf16.gmra.mxu0 %v375
    %v564 = vpop.f32.mrf.mxu0
    %v565 = vadd.f32 %v416, %v564
    %v566 = vpop.f32.mrf.mxu0
    %v567 = vpop.f32.mrf.mxu0
    %v568 = vadd.f32 %v416, %v567
    %v569 = vpop.f32.mrf.mxu0
    %570 = vmatprep.mubr.bf16.mxu0 %v378
    %571 = vmatmul.mubr.bf16.gmra.mxu0 %v377
    %v572 = vpop.f32.mrf.mxu0
    %v573 = vadd.f32 %v416, %v572
    %v574 = vpop.f32.mrf.mxu0
    %v575 = vpop.f32.mrf.mxu0
    %v576 = vadd.f32 %v416, %v575
    %v577 = vpop.f32.mrf.mxu0
    %578 = vdwg.mxu0
    %579 = vadd.xlane.f32.xlu0 %v549
    %v580 = vpop.xlane.xlu0 %579
    %581 = vadd.xlane.f32.xlu0 %v552
    %v582 = vpop.xlane.xlu0 %581
    %583 = vadd.xlane.f32.xlu0 %v557
    %v584 = vpop.xlane.xlu0 %583
    %585 = vadd.xlane.f32.xlu0 %v560
    %v586 = vpop.xlane.xlu0 %585
    %587 = vadd.xlane.f32.xlu0 %v565
    %v588 = vpop.xlane.xlu0 %587
    %589 = vadd.xlane.f32.xlu0 %v568
    %v590 = vpop.xlane.xlu0 %589
    %591 = vadd.xlane.f32.xlu0 %v573
    %v592 = vpop.xlane.xlu0 %591
    %593 = vadd.xlane.f32.xlu0 %v576
    %v594 = vpop.xlane.xlu0 %593
    %v595 = vsub.f32 %v580, %v549
    %v596 = vsub.f32 %v582, %v552
    %v597 = vsub.f32 %v584, %v557
    %v598 = vsub.f32 %v586, %v560
    %v599 = vsub.f32 %v588, %v565
    %v600 = vsub.f32 %v590, %v568
    %v601 = vsub.f32 %v592, %v573
    %v602 = vsub.f32 %v594, %v576
    %v603 = vmul.f32 %v595, 0.25
    %v604 = vmul.f32 %v596, 0.25
    %v605 = vmul.f32 %v597, 0.25
    %v606 = vmul.f32 %v598, 0.25
    %v607 = vmul.f32 %v599, 0.25
    %v608 = vmul.f32 %v600, 0.25
    %v609 = vmul.f32 %v601, 0.25
    %v610 = vmul.f32 %v602, 0.25
    %612 = vset.pattern.permute.xlu0 127
    %613 = vperm.xlu0 %612, %v549
    %v614 = vpop.permute.xlu0 %613
    %617 = vset.pattern.permute.xlu0 127
    %618 = vperm.xlu0 %617, %v552
    %v619 = vpop.permute.xlu0 %618
    %622 = vset.pattern.permute.xlu0 127
    %623 = vperm.xlu0 %622, %v557
    %v624 = vpop.permute.xlu0 %623
    %627 = vset.pattern.permute.xlu0 127
    %628 = vperm.xlu0 %627, %v560
    %v629 = vpop.permute.xlu0 %628
    %632 = vset.pattern.permute.xlu0 127
    %633 = vperm.xlu0 %632, %v565
    %v634 = vpop.permute.xlu0 %633
    %637 = vset.pattern.permute.xlu0 127
    %638 = vperm.xlu0 %637, %v568
    %v639 = vpop.permute.xlu0 %638
    %642 = vset.pattern.permute.xlu0 127
    %643 = vperm.xlu0 %642, %v573
    %v644 = vpop.permute.xlu0 %643
    %647 = vset.pattern.permute.xlu0 127
    %648 = vperm.xlu0 %647, %v576
    %v649 = vpop.permute.xlu0 %648
    %v651 = vadd.f32 %v549, %v614
    %v652 = vadd.f32 %v552, %v619
    %v653 = vadd.f32 %v557, %v624
    %v654 = vadd.f32 %v560, %v629
    %v655 = vadd.f32 %v565, %v634
    %v656 = vadd.f32 %v568, %v639
    %v657 = vadd.f32 %v573, %v644
    %v658 = vadd.f32 %v576, %v649
    %660 = vset.pattern.permute.xlu0 127
    %661 = vperm.xlu0 %660, %v603
    %v662 = vpop.permute.xlu0 %661
    %665 = vset.pattern.permute.xlu0 127
    %666 = vperm.xlu0 %665, %v604
    %v667 = vpop.permute.xlu0 %666
    %670 = vset.pattern.permute.xlu0 127
    %671 = vperm.xlu0 %670, %v605
    %v672 = vpop.permute.xlu0 %671
    %675 = vset.pattern.permute.xlu0 127
    %676 = vperm.xlu0 %675, %v606
    %v677 = vpop.permute.xlu0 %676
    %680 = vset.pattern.permute.xlu0 127
    %681 = vperm.xlu0 %680, %v607
    %v682 = vpop.permute.xlu0 %681
    %685 = vset.pattern.permute.xlu0 127
    %686 = vperm.xlu0 %685, %v608
    %v687 = vpop.permute.xlu0 %686
    %690 = vset.pattern.permute.xlu0 127
    %691 = vperm.xlu0 %690, %v609
    %v692 = vpop.permute.xlu0 %691
    %695 = vset.pattern.permute.xlu0 127
    %696 = vperm.xlu0 %695, %v610
    %v697 = vpop.permute.xlu0 %696
    %v699 = vsub.f32 %v651, %v662
    %v700 = vsub.f32 %v652, %v667
    %v701 = vsub.f32 %v653, %v672
    %v702 = vsub.f32 %v654, %v677
    %v703 = vsub.f32 %v655, %v682
    %v704 = vsub.f32 %v656, %v687
    %v705 = vsub.f32 %v657, %v692
    %v706 = vsub.f32 %v658, %v697
    %vm707 = vcmask 64512
    %708 = vst.msk [vmem:[%s5] sm:$0xff] %vm707, %v699
    %709 = vst.msk [vmem:[%s5 + $0x8] sm:$0xff] %vm707, %v700
    %710 = vst.msk [vmem:[%s5 + $0x10] sm:$0xff] %vm707, %v701
    %711 = vst.msk [vmem:[%s5 + $0x18] sm:$0xff] %vm707, %v702
    %712 = vst.msk [vmem:[%s5 + $0x20] sm:$0xff] %vm707, %v703
    %713 = vst.msk [vmem:[%s5 + $0x28] sm:$0xff] %vm707, %v704
    %714 = vst.msk [vmem:[%s5 + $0x30] sm:$0xff] %vm707, %v705
    %715 = vst.msk [vmem:[%s5 + $0x38] sm:$0xff] %vm707, %v706
    // Predicated region
    $region30: #{tpu_custom_call.1} parent=1 // pred_check
      _
    $region31: #{tpu_custom_call.1} parent=1 // pred_check_branch
      %717 = sbr.rel (0) target = $region33
    $region32: #{tpu_custom_call.1} parent=1 // pred_region
      _
    $region33: #{tpu_custom_call.1} parent=1 // pred_fallthru
      _
    // Predicated region
    $region34: #{tpu_custom_call.1} parent=1 // pred_check
      _
    $region35: #{tpu_custom_call.1} parent=1 // pred_check_branch
      %719 = sbr.rel (0) target = $region37
    $region36: #{tpu_custom_call.1} parent=1 // pred_region
      _
    $region37: #{tpu_custom_call.1} parent=1 // pred_fallthru
      _
    %720 = vsyncpa [#allocation3], 1
    %721 = vsyncpa [#allocation5], 1

</llo_original>
